<compile_context>
chip_gen: v7x
topology: tpu7x:2x2x1
jax: 0.10.0
libtpu: 0.0.40
codegen_flags: <defaults>
</compile_context>

<pallas_src>
import jax
import jax.numpy as jnp
from jax.experimental import pallas as pl
from jax.experimental.pallas import tpu as pltpu


def _choose_tile_hw(HW, C, itemsize):
    """Pick a lane-dim tile for the spatial axis.

    If the whole spatial extent fits in the per-tile byte budget, use a single
    tile (no tail masking at all). Otherwise use the largest multiple of 128
    that fits the budget.
    """
    # ~6 MiB for 4-byte inputs (no extra f32 cast temp), ~4 MiB for narrower
    # dtypes (the f32 cast for the sum path doubles the live footprint).
    target_bytes = (6 << 20) if itemsize >= 4 else (4 << 20)
    max_elems = max(128, target_bytes // max(1, C * itemsize))
    if HW <= max_elems:
        return HW
    t = (max_elems // 128) * 128
    return max(128, min(t, HW))


def _make_channel_attention_kernel(C, T_HW, HW, needs_mask):
    inv_hw = 1.0 / float(HW)

    def kernel(x_ref, w1_ref, w2_ref, o_ref, sum_sc, max_sc):
        # x_ref : (1, C, T_HW)  one spatial tile of one batch element (NCHW view)
        # w1    : (Cr, C)       fc1 weight (Conv2d(C, Cr, 1).weight[:, :, 0, 0])
        # w2    : (C, Cr)       fc2 weight
        # o_ref : (1, C, 1)     sigmoid(channel attention) for this batch element
        # sum_sc, max_sc : (C, 1) f32 running accumulators (VMEM scratch)
        hw_step = pl.program_id(1)
        n_hw = pl.num_programs(1)

        @pl.when(hw_step == 0)
        def _init():
            sum_sc[...] = jnp.zeros((C, 1), jnp.float32)
            max_sc[...] = jnp.full((C, 1), -jnp.inf, jnp.float32)

        def accumulate(masked):
            xn = x_ref[0]                                   # (C, T_HW) native dtype
            xf = xn.astype(jnp.float32)                     # f32 for the sum path
            if masked:
                col = jax.lax.broadcasted_iota(jnp.int32, (C, T_HW), 1)
                valid = (hw_step * T_HW + col) < HW
                xf_sum = jnp.where(valid, xf, 0.0)
                xn_max = jnp.where(valid, xn, -jnp.inf)
            else:
                xf_sum = xf
                xn_max = xn
            # Pre-scale each tile's partial sum by 1/HW: keeps the accumulator
            # bounded (better precision for huge HW); mathematically identical.
            sum_sc[...] = sum_sc[...] + (
                jnp.sum(xf_sum, axis=-1, keepdims=True) * inv_hw)
            # Max reduced in the input dtype (exact), cast the tiny result only.
            tile_max = jnp.max(xn_max, axis=-1, keepdims=True).astype(jnp.float32)
            max_sc[...] = jnp.maximum(max_sc[...], tile_max)

        if needs_mask:
            # Mask work (iota + 2x where) only on the last (partial) tile; the
            # steady-state loop stays DMA-bound.
            @pl.when(hw_step < n_hw - 1)
            def _acc_body():
                accumulate(False)

            @pl.when(hw_step == n_hw - 1)
            def _acc_tail():
                accumulate(True)
        else:
            accumulate(False)

        @pl.when(hw_step == n_hw - 1)
        def _finalize():
            avg = sum_sc[...]                                   # already the mean
            pooled = jnp.concatenate([avg, max_sc[...]], axis=1)  # (C, 2)
            # Shared MLP applied to both pooled vectors at once (columns).
            h = jnp.maximum(
                jnp.dot(w1_ref[...], pooled,
                        preferred_element_type=jnp.float32), 0.0)   # (Cr, 2)
            out2 = jnp.dot(w2_ref[...], h,
                           preferred_element_type=jnp.float32)       # (C, 2)
            gate = jax.nn.sigmoid(out2[:, 0:1] + out2[:, 1:2])        # (C, 1)
            o_ref[...] = gate.reshape(1, C, 1).astype(o_ref.dtype)

    return kernel


def channel_attention(x_nchw, w1, w2):
    """x_nchw: (B, C, H, W); w1: (C//ratio, C); w2: (C, C//ratio). Returns (B, C, 1, 1)."""
    B, C, H, W = x_nchw.shape
    Cr = w1.shape[0]
    HW = H * W

    x = x_nchw.reshape(B, C, HW)               # free view, no HBM transpose
    itemsize = jnp.dtype(x.dtype).itemsize
    T_HW = _choose_tile_hw(HW, C, itemsize)
    n_hw = pl.cdiv(HW, T_HW)
    needs_mask = (HW % T_HW) != 0

    # VMEM budget: 2 double-buffered input tiles + ~3 tile-sized f32 temporaries
    # (cast / masked-select peaks) + slack. Clamp to <= 48 MiB so v7x (64 MiB
    # physical) keeps headroom for Mosaic internal scratch; floor of 32 MiB so
    # the v5e 16 MiB scoped default never rejects the tiles.
    tile_bytes = C * T_HW * itemsize
    tile_f32_bytes = C * T_HW * 4
    vmem_limit = 2 * tile_bytes + 3 * tile_f32_bytes + (4 << 20)
    vmem_limit = int(min(48 << 20, max(32 << 20, vmem_limit)))

    w_bytes = (w1.size * jnp.dtype(w1.dtype).itemsize
               + w2.size * jnp.dtype(w2.dtype).itemsize)
    cost = pl.CostEstimate(
        flops=int(2 * B * C * HW + 8 * B * C * Cr),
        transcendentals=int(B * C),
        bytes_accessed=int(x.size * itemsize + w_bytes + B * C * itemsize),
    )

    out = pl.pallas_call(
        _make_channel_attention_kernel(C, T_HW, HW, needs_mask),
        out_shape=jax.ShapeDtypeStruct((B, C, 1), x.dtype),
        grid_spec=pltpu.PrefetchScalarGridSpec(
            num_scalar_prefetch=0,
            grid=(B, n_hw),
            in_specs=[
                pl.BlockSpec((1, C, T_HW), lambda b, h: (b, 0, h)),
                pl.BlockSpec((Cr, C), lambda b, h: (0, 0)),
                pl.BlockSpec((C, Cr), lambda b, h: (0, 0)),
            ],
            out_specs=pl.BlockSpec((1, C, 1), lambda b, h: (b, 0, 0)),
            scratch_shapes=[
                pltpu.VMEM((C, 1), jnp.float32),   # running mean (pre-scaled sum)
                pltpu.VMEM((C, 1), jnp.float32),   # running max
            ],
        ),
        compiler_params=pltpu.CompilerParams(
            dimension_semantics=("parallel", "arbitrary"),
            vmem_limit_bytes=vmem_limit,
        ),
        cost_estimate=cost,
    )(x, w1, w2)

    return out.reshape(B, C, 1, 1)


def channel_attention_reference(x, w1, w2):
    # Pure-JAX reference reproducing the PyTorch forward exactly.
    avg = jnp.mean(x, axis=(2, 3), keepdims=True)             # (B, C, 1, 1)
    mx = jnp.max(x, axis=(2, 3), keepdims=True)               # (B, C, 1, 1)

    def mlp(p):
        h = jnp.maximum(jnp.einsum("rc,bcij->brij", w1, p), 0.0)
        return jnp.einsum("cr,brij->bcij", w2, h)

    return jax.nn.sigmoid(mlp(avg) + mlp(mx))


if __name__ == "__main__":
    B, C, H, W = 2, 16, 16, 16
    ratio = 8
    Cr = C // ratio

    key = jax.random.PRNGKey(0)
    kx, k1, k2 = jax.random.split(key, 3)
    x = jax.random.normal(kx, (B, C, H, W), dtype=jnp.float32)
    # Synthetic weights matching Conv2d(C, Cr, 1, bias=False) -> (Cr, C) and
    # Conv2d(Cr, C, 1, bias=False) -> (C, Cr), roughly kaiming-scaled.
    w1 = jax.random.normal(k1, (Cr, C), dtype=jnp.float32) * (1.0 / jnp.sqrt(C))
    w2 = jax.random.normal(k2, (C, Cr), dtype=jnp.float32) * (1.0 / jnp.sqrt(Cr))

    out = channel_attention(x, w1, w2)
    out = jax.block_until_ready(out)

    ref = channel_attention_reference(x, w1, w2)
    assert out.shape == (B, C, 1, 1)
    assert jnp.allclose(out, ref, atol=1e-5, rtol=1e-5), "mismatch vs reference"

    print("KERNEL_OK")
</pallas_src>

<mosaic_0001>
module attributes {stable_mosaic.version = 11 : i64} {
  func.func @kernel(%arg0: i32, %arg1: i32, %arg2: memref<1x16x256xf32, #tpu.memory_space<vmem>>, %arg3: memref<2x16xf32, #tpu.memory_space<vmem>>, %arg4: memref<16x2xf32, #tpu.memory_space<vmem>>, %arg5: memref<1x16x1xf32, #tpu.memory_space<vmem>>, %arg6: memref<16x1xf32, #tpu.memory_space<vmem>>, %arg7: memref<16x1xf32, #tpu.memory_space<vmem>>) attributes {dimension_semantics = [#tpu.dimension_semantics<parallel>, #tpu.dimension_semantics<arbitrary>], iteration_bounds = array<i64: 2, 1>, scalar_prefetch = 0 : i64, scratch_operands = 2 : i64, tpu.core_type = #tpu.core_type<tc>, window_params = [{transform_indices = @transform_0, window_bounds = array<i64: 1, 16, 256>}, {pipeline_mode = #tpu.pipeline_mode<synchronous>, transform_indices = @transform_1, window_bounds = array<i64: 2, 16>}, {pipeline_mode = #tpu.pipeline_mode<synchronous>, transform_indices = @transform_2, window_bounds = array<i64: 16, 2>}, {transform_indices = @transform_3, window_bounds = array<i64: 1, 16, 1>}]} {
    %c0_i32 = arith.constant 0 : i32
    %0 = arith.cmpi eq, %arg1, %c0_i32 : i32
    %1 = arith.extui %0 : i1 to i32
    %c0_i32_0 = arith.constant 0 : i32
    %2 = arith.cmpi ne, %1, %c0_i32_0 : i32
    scf.if %2 {
      %cst_15 = arith.constant 0.000000e+00 : f32
      %20 = vector.broadcast %cst_15 : f32 to vector<16x1xf32>
      %c0_16 = arith.constant 0 : index
      %c0_17 = arith.constant 0 : index
      %21 = vector.load %arg6[%c0_16, %c0_17] : memref<16x1xf32, #tpu.memory_space<vmem>>, vector<16x1xf32>
      tpu.vector_store %arg6[%c0_16, %c0_17], %20 {strides = array<i32>} : memref<16x1xf32, #tpu.memory_space<vmem>>, vector<16x1xf32>,
      %cst_18 = arith.constant 0xFF800000 : f32
      %22 = vector.broadcast %cst_18 : f32 to vector<16x1xf32>
      %c0_19 = arith.constant 0 : index
      %c0_20 = arith.constant 0 : index
      %23 = vector.load %arg7[%c0_19, %c0_20] : memref<16x1xf32, #tpu.memory_space<vmem>>, vector<16x1xf32>
      tpu.vector_store %arg7[%c0_19, %c0_20], %22 {strides = array<i32>} : memref<16x1xf32, #tpu.memory_space<vmem>>, vector<16x1xf32>,
    } else {
    }
    %c0 = arith.constant 0 : index
    %c0_1 = arith.constant 0 : index
    %c0_2 = arith.constant 0 : index
    %3 = vector.load %arg2[%c0, %c0_1, %c0_2] : memref<1x16x256xf32, #tpu.memory_space<vmem>>, vector<1x16x256xf32>
    %4 = vector.shape_cast %3 : vector<1x16x256xf32> to vector<16x256xf32>
    %c0_3 = arith.constant 0 : index
    %c0_4 = arith.constant 0 : index
    %5 = vector.load %arg6[%c0_3, %c0_4] : memref<16x1xf32, #tpu.memory_space<vmem>>, vector<16x1xf32>
    %cst = arith.constant dense<0.000000e+00> : vector<16xf32>
    %6 = vector.multi_reduction <add>, %4, %cst [1] : vector<16x256xf32> to vector<16xf32>
    %7 = vector.shape_cast %6 : vector<16xf32> to vector<16x1xf32>
    %cst_5 = arith.constant 3.906250e-03 : f32
    %8 = vector.broadcast %cst_5 : f32 to vector<16x1xf32>
    %9 = arith.mulf %7, %8 : vector<16x1xf32>
    %10 = arith.addf %5, %9 : vector<16x1xf32>
    %c0_6 = arith.constant 0 : index
    %c0_7 = arith.constant 0 : index
    %11 = vector.load %arg6[%c0_6, %c0_7] : memref<16x1xf32, #tpu.memory_space<vmem>>, vector<16x1xf32>
    tpu.vector_store %arg6[%c0_6, %c0_7], %10 {strides = array<i32>} : memref<16x1xf32, #tpu.memory_space<vmem>>, vector<16x1xf32>,
    %cst_8 = arith.constant dense<0xFF800000> : vector<16xf32>
    %12 = vector.multi_reduction <maximumf>, %4, %cst_8 [1] : vector<16x256xf32> to vector<16xf32>
    %13 = vector.shape_cast %12 : vector<16xf32> to vector<16x1xf32>
    %c0_9 = arith.constant 0 : index
    %c0_10 = arith.constant 0 : index
    %14 = vector.load %arg7[%c0_9, %c0_10] : memref<16x1xf32, #tpu.memory_space<vmem>>, vector<16x1xf32>
    %15 = arith.maximumf %14, %13 : vector<16x1xf32>
    %c0_11 = arith.constant 0 : index
    %c0_12 = arith.constant 0 : index
    %16 = vector.load %arg7[%c0_11, %c0_12] : memref<16x1xf32, #tpu.memory_space<vmem>>, vector<16x1xf32>
    tpu.vector_store %arg7[%c0_11, %c0_12], %15 {strides = array<i32>} : memref<16x1xf32, #tpu.memory_space<vmem>>, vector<16x1xf32>,
    %c0_i32_13 = arith.constant 0 : i32
    %17 = arith.cmpi eq, %arg1, %c0_i32_13 : i32
    %18 = arith.extui %17 : i1 to i32
    %c0_i32_14 = arith.constant 0 : i32
    %19 = arith.cmpi ne, %18, %c0_i32_14 : i32
    scf.if %19 {
      %c0_15 = arith.constant 0 : index
      %c0_16 = arith.constant 0 : index
      %20 = vector.load %arg6[%c0_15, %c0_16] : memref<16x1xf32, #tpu.memory_space<vmem>>, vector<16x1xf32>
      %c0_17 = arith.constant 0 : index
      %c0_18 = arith.constant 0 : index
      %21 = vector.load %arg7[%c0_17, %c0_18] : memref<16x1xf32, #tpu.memory_space<vmem>>, vector<16x1xf32>
      %22 = tpu.concatenate %20, %21 in 1 : vector<16x1xf32>, vector<16x1xf32> -> vector<16x2xf32>
      %c0_19 = arith.constant 0 : index
      %c0_20 = arith.constant 0 : index
      %23 = vector.load %arg3[%c0_19, %c0_20] : memref<2x16xf32, #tpu.memory_space<vmem>>, vector<2x16xf32>
      %cst_21 = arith.constant dense<0.000000e+00> : vector<2x2xf32>
      %24 = tpu.matmul %23, %22, %cst_21 {dimension_numbers = #tpu.dot_dimension_numbers<[1], [0], [0], [1], [0, 0, 1, 1], [], []>} : vector<2x16xf32>, vector<16x2xf32>, vector<2x2xf32> -> vector<2x2xf32>
      %cst_22 = arith.constant 0.000000e+00 : f32
      %25 = vector.broadcast %cst_22 : f32 to vector<2x2xf32>
      %26 = arith.maximumf %24, %25 : vector<2x2xf32>
      %c0_23 = arith.constant 0 : index
      %c0_24 = arith.constant 0 : index
      %27 = vector.load %arg4[%c0_23, %c0_24] : memref<16x2xf32, #tpu.memory_space<vmem>>, vector<16x2xf32>
      %cst_25 = arith.constant dense<0.000000e+00> : vector<16x2xf32>
      %28 = tpu.matmul %27, %26, %cst_25 {dimension_numbers = #tpu.dot_dimension_numbers<[1], [0], [0], [1], [0, 0, 1, 1], [], []>} : vector<16x2xf32>, vector<2x2xf32>, vector<16x2xf32> -> vector<16x2xf32>
      %29 = vector.extract_strided_slice %28 {offsets = [0, 0], sizes = [16, 1], strides = [1, 1]} : vector<16x2xf32> to vector<16x1xf32>
      %30 = vector.extract_strided_slice %28 {offsets = [0, 1], sizes = [16, 1], strides = [1, 1]} : vector<16x2xf32> to vector<16x1xf32>
      %31 = arith.addf %29, %30 : vector<16x1xf32>
      %32 = arith.negf %31 : vector<16x1xf32>
      %33 = math.exp %32 : vector<16x1xf32>
      %cst_26 = arith.constant 1.000000e+00 : f32
      %34 = vector.broadcast %cst_26 : f32 to vector<16x1xf32>
      %35 = arith.addf %34, %33 : vector<16x1xf32>
      %36 = arith.divf %34, %35 : vector<16x1xf32>
      %37 = vector.shape_cast %36 : vector<16x1xf32> to vector<1x16x1xf32>
      %c0_27 = arith.constant 0 : index
      %c0_28 = arith.constant 0 : index
      %c0_29 = arith.constant 0 : index
      %38 = vector.load %arg5[%c0_27, %c0_28, %c0_29] : memref<1x16x1xf32, #tpu.memory_space<vmem>>, vector<1x16x1xf32>
      tpu.vector_store %arg5[%c0_27, %c0_28, %c0_29], %37 {strides = array<i32>} : memref<1x16x1xf32, #tpu.memory_space<vmem>>, vector<1x16x1xf32>,
    } else {
    }
    return
  }
  func.func @transform_0(%arg0: i32, %arg1: i32) -> (i32, i32, i32) {
    %c0_i32 = arith.constant 0 : i32
    %c0_i32_0 = arith.constant 0 : i32
    return %arg0, %c0_i32, %arg1 : i32, i32, i32
  }
  func.func @transform_1(%arg0: i32, %arg1: i32) -> (i32, i32) {
    %c0_i32 = arith.constant 0 : i32
    %c0_i32_0 = arith.constant 0 : i32
    %c0_i32_1 = arith.constant 0 : i32
    return %c0_i32, %c0_i32_0 : i32, i32
  }
  func.func @transform_2(%arg0: i32, %arg1: i32) -> (i32, i32) {
    %c0_i32 = arith.constant 0 : i32
    %c0_i32_0 = arith.constant 0 : i32
    %c0_i32_1 = arith.constant 0 : i32
    return %c0_i32, %c0_i32_0 : i32, i32
  }
  func.func @transform_3(%arg0: i32, %arg1: i32) -> (i32, i32, i32) {
    %c0_i32 = arith.constant 0 : i32
    %c0_i32_0 = arith.constant 0 : i32
    %c0_i32_1 = arith.constant 0 : i32
    return %arg0, %c0_i32, %c0_i32_0 : i32, i32, i32
  }
}

</mosaic_0001>

<llo_original>
// kernel: tpu_custom_call.1
$region0: #{tpu_custom_call.1}
  #allocation0 [shape = 'u32[]', space=smem, size = 0x4, offset = 0x4, fixed_abs, tag = 'smem constant byte address 0x4 - core index']
  #allocation1 [shape = 'u32[144,128]{1,0:T(1,128)}', space=vmem, size = 0x12000, scoped, tag = 'internal scratch']
  #allocation2 [shape = 'f32[16,1]{1,0:T(8,128)}', space=vmem, size = 0x2000, scoped, tag = 'scratch operand']
  #allocation3 [shape = 'f32[16,1]{1,0:T(8,128)}', space=vmem, size = 0x2000, scoped, tag = 'scratch operand']
  %s0 = inlined_call_operand.hbm [shape: f32[2,16,256], index: 0, kind: input, shape index: {}]
  %s1 = inlined_call_operand.vmem [shape: f32[2,16], index: 1, kind: input, shape index: {}]
  %s2 = inlined_call_operand.vmem [shape: f32[16,2], index: 2, kind: input, shape index: {}]
  %s3 = inlined_call_operand.vmem [shape: f32[2,16,1], index: 3, kind: output, shape index: {}]
  %s4 = sld [smem:[#allocation0]]
  $region57: #{tpu_custom_call.1} parent=0
    _
  %s6 = ssub.s32 1, %s4
  %s7 = scalar_select 0, %s6, %s4
  $region1: #{tpu_custom_call.1} parent=0
    #allocation4 [shape = 'u8[32768]{0}', space=vmem, size = 0x8000, scoped, tag = 'input window, operand 0']
    #allocation5 [shape = 's32[2]{0}', space=sflag, size = 0x8, scoped, tag = 'scoped memory for tpu_custom_call.1']
    %8 = vsyncpa [#allocation5], 0
    %s9 = scalar_lea.sflag [#allocation5], 1
    %10 = vsyncpa %s9, 0
    loop: start=0, step=1, limit=4
    $region2: #{tpu_custom_call.1} parent=1 // loop_pre_header
      _
    $region3: #{tpu_custom_call.1} parent=1 // loop_header
      %s12 = sphi 0, %s16
      %p13 = scmp.ge.s32.totalorder %s12, 4
      %s19 = sphi 0, %s31
      %s20 = sphi 0, %s27
      %s21 = sphi 0, %s19
      %s22 = sphi 0, %s20
      %s23 = sphi 0, %s21
      %s24 = sphi 0, %s22
      %s36 = sphi 0, %s38
      %s39 = sphi 0, %s36
      %s40 = sphi 0, %s39
      %s56 = sphi 0, %s40
      %s60 = sphi 0, %s60
      %s62 = sphi 0, %s60
      %s63 = sphi 0, %s62
      %s77 = sphi 0, %s63
      %s81 = sphi 0, %s81
      %s83 = sphi 0, %s81
      %s84 = sphi 0, %s83
      %s98 = sphi 0, %s84
      %s104 = sphi 0, %s106
      %s107 = sphi 0, %s104
      %s108 = sphi 0, %s107
      %s124 = sphi 0, %s108
    $region4: #{tpu_custom_call.1} parent=1 // loop_header_branch
      %15 = sbr.rel (%p13) target = $region8
    $region5: #{tpu_custom_call.1} parent=1 // loop_body
      %s17 = ssub.s32 %s12, 1
      %s18 = ssub.s32 %s12, 2
      %s25 = sadd.s32 1, %s20
      %p26 = scmp.ge.s32.totalorder %s25, 1
      %s27 = scalar_select %p26, 0, %s25
      %s28 = sadd.s32 1, %s19
      %s29 = scalar_select %p26, %s28, %s19
      %p30 = scmp.ge.s32.totalorder %s29, 2
      %s31 = scalar_select %p30, 0, %s29
      %s32 = ssub.s32 %s19, %s31
      %s33 = ssub.s32 %s20, %s27
      %s34 = sor.u32 %s32, %s33
      %p35 = scmp.eq.s32.totalorder %s34, 0
      %s37 = sadd.s32 %s36, 1
      %s38 = scalar_select %p35, %s36, %s37
      %p41 = pneg %p35
      %p42 = scmp.eq.s32.totalorder %s12, 1
      %p43 = por %p41, %p42
      %p44 = scmp.ne.s32.totalorder %s36, %s39
      %p45 = scmp.eq.s32.totalorder %s12, 0
      %p46 = por %p44, %p45
      %p47 = scmp.ne.s32.totalorder %s36, %s39
      %p48 = scmp.eq.s32.totalorder %s17, 1
      %p49 = por %p47, %p48
      %p50 = scmp.ne.s32.totalorder %s39, %s40
      %p51 = scmp.eq.s32.totalorder %s17, 0
      %p52 = por %p50, %p51
      %p53 = scmp.ne.s32.totalorder %s39, %s40
      %p54 = scmp.eq.s32.totalorder %s18, 1
      %p55 = por %p53, %p54
      %p57 = scmp.ne.s32.totalorder %s40, %s56
      %p58 = scmp.eq.s32.totalorder %s18, 0
      %p59 = por %p57, %p58
      %s61 = sadd.s32 %s60, 1
      %p64 = scmp.eq.s32.totalorder %s12, 1
      %p65 = scmp.ne.s32.totalorder %s60, %s62
      %p66 = scmp.eq.s32.totalorder %s12, 0
      %p67 = por %p65, %p66
      %p68 = scmp.ne.s32.totalorder %s60, %s62
      %p69 = scmp.eq.s32.totalorder %s17, 1
      %p70 = por %p68, %p69
      %p71 = scmp.ne.s32.totalorder %s62, %s63
      %p72 = scmp.eq.s32.totalorder %s17, 0
      %p73 = por %p71, %p72
      %p74 = scmp.ne.s32.totalorder %s62, %s63
      %p75 = scmp.eq.s32.totalorder %s18, 1
      %p76 = por %p74, %p75
      %p78 = scmp.ne.s32.totalorder %s63, %s77
      %p79 = scmp.eq.s32.totalorder %s18, 0
      %p80 = por %p78, %p79
      %s82 = sadd.s32 %s81, 1
      %p85 = scmp.eq.s32.totalorder %s12, 1
      %p86 = scmp.ne.s32.totalorder %s81, %s83
      %p87 = scmp.eq.s32.totalorder %s12, 0
      %p88 = por %p86, %p87
      %p89 = scmp.ne.s32.totalorder %s81, %s83
      %p90 = scmp.eq.s32.totalorder %s17, 1
      %p91 = por %p89, %p90
      %p92 = scmp.ne.s32.totalorder %s83, %s84
      %p93 = scmp.eq.s32.totalorder %s17, 0
      %p94 = por %p92, %p93
      %p95 = scmp.ne.s32.totalorder %s83, %s84
      %p96 = scmp.eq.s32.totalorder %s18, 1
      %p97 = por %p95, %p96
      %p99 = scmp.ne.s32.totalorder %s84, %s98
      %p100 = scmp.eq.s32.totalorder %s18, 0
      %p101 = por %p99, %p100
      %s102 = ssub.s32 %s19, %s31
      %p103 = scmp.eq.s32.totalorder %s102, 0
      %s105 = sadd.s32 %s104, 1
      %s106 = scalar_select %p103, %s104, %s105
      %p109 = pneg %p103
      %p110 = scmp.eq.s32.totalorder %s12, 1
      %p111 = por %p109, %p110
      %p112 = scmp.ne.s32.totalorder %s104, %s107
      %p113 = scmp.eq.s32.totalorder %s12, 0
      %p114 = por %p112, %p113
      %p115 = scmp.ne.s32.totalorder %s104, %s107
      %p116 = scmp.eq.s32.totalorder %s17, 1
      %p117 = por %p115, %p116
      %p118 = scmp.ne.s32.totalorder %s107, %s108
      %p119 = scmp.eq.s32.totalorder %s17, 0
      %p120 = por %p118, %p119
      %p121 = scmp.ne.s32.totalorder %s107, %s108
      %p122 = scmp.eq.s32.totalorder %s18, 1
      %p123 = por %p121, %p122
      %p125 = scmp.ne.s32.totalorder %s108, %s124
      %p126 = scmp.eq.s32.totalorder %s18, 0
      %p127 = por %p125, %p126
      %p128 = scmp.le.s32.totalorder 1, %s12
      %p129 = scmp.lt.s32.totalorder %s12, 3
      %p130 = pnand %p128, %p129
      %p131 = pneg %p130
      // Predicated region
      $region9: #{tpu_custom_call.1} parent=5 // pred_check
        _
      $region10: #{tpu_custom_call.1} parent=5 // pred_check_branch
        %133 = sbr.rel (%p130) target = $region12
      $region11: #{tpu_custom_call.1} parent=5 // pred_region
        %s134 = ssub.s32 %s12, 1
        // Predicated region
        $region13: #{tpu_custom_call.1} parent=11 // pred_check
          %p135 = pneg %p73
        $region14: #{tpu_custom_call.1} parent=11 // pred_check_branch
          %137 = sbr.rel (%p135) target = $region16
        $region15: #{tpu_custom_call.1} parent=11 // pred_region
          _
        $region16: #{tpu_custom_call.1} parent=11 // pred_fallthru
          _
        // Predicated region
        $region17: #{tpu_custom_call.1} parent=11 // pred_check
          %p138 = pneg %p94
        $region18: #{tpu_custom_call.1} parent=11 // pred_check_branch
          %140 = sbr.rel (%p138) target = $region20
        $region19: #{tpu_custom_call.1} parent=11 // pred_region
          _
        $region20: #{tpu_custom_call.1} parent=11 // pred_fallthru
          _
      $region12: #{tpu_custom_call.1} parent=5 // pred_fallthru
        _
      %p141 = scmp.lt.s32.totalorder %s12, 2
      // Predicated region
      $region21: #{tpu_custom_call.1} parent=5 // pred_check
        %p142 = pneg %p141
      $region22: #{tpu_custom_call.1} parent=5 // pred_check_branch
        %144 = sbr.rel (%p142) target = $region24
      $region23: #{tpu_custom_call.1} parent=5 // pred_region
        // Predicated region
        $region25: #{tpu_custom_call.1} parent=23 // pred_check
          %p145 = pneg %p46
        $region26: #{tpu_custom_call.1} parent=23 // pred_check_branch
          %147 = sbr.rel (%p145) target = $region28
        $region27: #{tpu_custom_call.1} parent=23 // pred_region
          %s148 = sand.u32 %s36, 1
          %s149 = scalar_lea.sflag [#allocation5], %s148
          %s150 = sand.u32 %s36, 1
          %s151 = smul.addr %s150, 32
          %s152 = scalar_lea.vmem [#allocation4], %s151
          %s153 = smul.u32 2, %s20
          %s155 = ssub.s32 512, 512
          %156 = vsyncadd %s149, %s155
          %s157 = smul.addr %s19, 4
          %s158 = sadd.s32 %s153, %s157
          %s159 = smul.addr %s158, 128
          %s160 = scalar_lea.hbm %s0, %s159
          %s161 = sshll.u32 %s152, 4
          %s162 = int_to_ptr.vmem [resolvable:$true] %s161
          %167 = dma.hbm_to_vmem [thread:$0]  %s160, 512, %s162, %s149, 256, 256, 16
        $region28: #{tpu_custom_call.1} parent=23 // pred_fallthru
          _
      $region24: #{tpu_custom_call.1} parent=5 // pred_fallthru
        _
      %p168 = scmp.le.s32.totalorder 1, %s12
      %p169 = scmp.lt.s32.totalorder %s12, 3
      %p170 = pnand %p168, %p169
      %p171 = pneg %p170
      // Predicated region
      $region29: #{tpu_custom_call.1} parent=5 // pred_check
        _
      $region30: #{tpu_custom_call.1} parent=5 // pred_check_branch
        %173 = sbr.rel (%p170) target = $region32
      $region31: #{tpu_custom_call.1} parent=5 // pred_region
        %s174 = ssub.s32 %s12, 1
        %s175 = sand.u32 %s39, 1
        %s176 = scalar_lea.sflag [#allocation5], %s175
        %s177 = sand.u32 %s39, 1
        %s178 = smul.addr %s177, 32
        %s179 = scalar_lea.vmem [#allocation4], %s178
        // Predicated region
        $region33: #{tpu_custom_call.1} parent=31 // pred_check
          %p180 = pneg %p52
        $region34: #{tpu_custom_call.1} parent=31 // pred_check_branch
          %182 = sbr.rel (%p180) target = $region36
        $region35: #{tpu_custom_call.1} parent=31 // pred_region
          %183 = dma.done %s176, 512
        $region36: #{tpu_custom_call.1} parent=31 // pred_fallthru
          _
        %s184 = sand.u32 %s39, 1
        %s185 = scalar_lea.sflag [#allocation5], %s184
        %s186 = sand.u32 %s39, 1
        %s187 = smul.addr %s186, 32
        %s188 = scalar_lea.vmem [#allocation4], %s187
        %p189 = pneg %p52
        %p190 = pneg %p49
        %p191 = pneg %p73
        %p192 = pneg %p70
        %p193 = pneg %p94
        %p194 = pneg %p91
        %p195 = pneg %p120
        %p196 = pneg %p117
        %p197 = scmp.lt.s32.totalorder %s21, 1
        %s198 = scalar_select %p197, %s21, 1
        %s199 = smul.addr %s198, 2
        %s200 = smul.addr %s199, 8
        %s201 = scalar_lea.vmem %s3, %s200
        %s202 = smul.u32 2, %s22
        %p203 = scmp.lt.s32.totalorder %s21, 1
        %s204 = scalar_select %p203, %s21, 1
        %s205 = smul.addr %s204, 2
        %s206 = smul.addr %s205, 8
        %s207 = scalar_lea.vmem %s3, %s206
        %p208 = scmp.eq.s32.totalorder %s22, 0
        // Predicated region
        $region37: #{tpu_custom_call.1} parent=31 // pred_check
          %p209 = pneg %p208
        $region38: #{tpu_custom_call.1} parent=31 // pred_check_branch
          %211 = sbr.rel (%p209) target = $region40
        $region39: #{tpu_custom_call.1} parent=31 // pred_region
          %vm212 = vcmask 7168
          %213 = vst.msk [vmem:[#allocation2] sm:$0xff] %vm212, 0.0
          %214 = vst.msk [vmem:[#allocation2 + $0x8] sm:$0xff] %vm212, 0.0
          %215 = vst.msk [vmem:[#allocation3] sm:$0xff] %vm212, -inf
          %216 = vst.msk [vmem:[#allocation3 + $0x8] sm:$0xff] %vm212, -inf
        $region40: #{tpu_custom_call.1} parent=31 // pred_fallthru
          _
        %v217 = vld [vmem:[%s179] sm:$0xff]
        %v218 = vld [vmem:[%s179 + $0x8] sm:$0xff]
        %v219 = vld [vmem:[%s179 + $0x10] sm:$0xff]
        %v220 = vld [vmem:[%s179 + $0x18] sm:$0xff]
        %v221 = vld [vmem:[#allocation2] sm:$0xff]
        %v222 = vld [vmem:[#allocation2 + $0x8] sm:$0xff]
        %v223 = vadd.f32 %v217, %v218
        %224 = vadd.xlane.f32.xlu0 %v223
        %v225 = vpop.xlane.xlu0 %224
        %v226 = vadd.f32 %v219, %v220
        %227 = vadd.xlane.f32.xlu0 %v226
        %v228 = vpop.xlane.xlu0 %227
        %v229 = vmul.f32 %v225, 0.00390625
        %v230 = vmul.f32 %v228, 0.00390625
        %v231 = vadd.f32 %v221, %v229
        %v232 = vadd.f32 %v222, %v230
        %vm233 = vcmask 7168
        %234 = vst.msk [vmem:[#allocation2] sm:$0xff] %vm233, %v231
        %235 = vst.msk [vmem:[#allocation2 + $0x8] sm:$0xff] %vm233, %v232
        %v236 = vmax.f32 %v217, %v218
        %237 = vmax.xlane.f32.xlu0 %v236
        %v238 = vpop.xlane.xlu0 %237
        %v239 = vmax.f32 %v219, %v220
        %240 = vmax.xlane.f32.xlu0 %v239
        %v241 = vpop.xlane.xlu0 %240
        %v242 = vld [vmem:[#allocation3] sm:$0xff]
        %v243 = vld [vmem:[#allocation3 + $0x8] sm:$0xff]
        %v244 = vmax.f32 %v242, %v238
        %v245 = vmax.f32 %v243, %v241
        %246 = vst.msk [vmem:[#allocation3] sm:$0xff] %vm233, %v244
        %247 = vst.msk [vmem:[#allocation3 + $0x8] sm:$0xff] %vm233, %v245
        // Predicated region
        $region41: #{tpu_custom_call.1} parent=31 // pred_check
          %p248 = pneg %p208
        $region42: #{tpu_custom_call.1} parent=31 // pred_check_branch
          %250 = sbr.rel (%p248) target = $region44
        $region43: #{tpu_custom_call.1} parent=31 // pred_region
          %v251 = vld [vmem:[#allocation2] sm:$0xff]
          %v252 = vld [vmem:[#allocation2 + $0x8] sm:$0xff]
          %v253 = vld [vmem:[#allocation3] sm:$0xff]
          %v254 = vld [vmem:[#allocation3 + $0x8] sm:$0xff]
          %257 = vrot.lane.b32.xlu0 %v253, 1
          %v258 = vpop.permute.xlu0 %257
          %259 = vrot.lane.b32.xlu0 %v254, 1
          %v260 = vpop.permute.xlu0 %259
          %v263 = vsel %vm233, %v251, %v258
          %v264 = vsel %vm233, %v252, %v260
          %v265 = vld [vmem:[%s1] sm:$0x3]
          %vm266 = vcmask 130048
          %v268 = vsel %vm266, %v265, 0
          %270 = vmatprep.subr.mxu0 0.0
          %271 = vmatpush1.msra.mxu0 %v263
          %272 = vmatprep.subr.mxu0 0.0
          %273 = vmatpush1.msra.mxu0 %v264
          %274 = vmatprep.subr.mxu0 0.0
          %275 = vmatpush1.msra.mxu0 0.0
          %276 = vmatprep.subr.mxu0 0.0
          %277 = vmatpush1.msra.mxu0 0.0
          %278 = vmatprep.subr.mxu0 0.0
          %279 = vmatpush1.msra.mxu0 0.0
          %280 = vmatprep.subr.mxu0 0.0
          %281 = vmatpush1.msra.mxu0 0.0
          %282 = vmatprep.subr.mxu0 0.0
          %283 = vmatpush1.msra.mxu0 0.0
          %284 = vmatprep.subr.mxu0 0.0
          %285 = vmatpush1.msra.mxu0 0.0
          %286 = vmatprep.subr.mxu0 0.0
          %287 = vmatpush1.msra.mxu0 0.0
          %288 = vmatprep.subr.mxu0 0.0
          %289 = vmatpush1.msra.mxu0 0.0
          %290 = vmatprep.subr.mxu0 0.0
          %291 = vmatpush1.msra.mxu0 0.0
          %292 = vmatprep.subr.mxu0 0.0
          %293 = vmatpush1.msra.mxu0 0.0
          %294 = vmatprep.subr.mxu0 0.0
          %295 = vmatpush1.msra.mxu0 0.0
          %296 = vmatprep.subr.mxu0 0.0
          %297 = vmatpush1.msra.mxu0 0.0
          %298 = vmatprep.subr.mxu0 0.0
          %299 = vmatpush1.msra.mxu0 0.0
          %300 = vmatprep.subr.mxu0 0.0
          %301 = vmatpush1.msra.mxu0 0.0
          %302 = vmatprep.subr.mxu0 0.0
          %303 = vmatpush1.msra.mxu0 0.0
          %304 = vmatprep.subr.mxu0 0.0
          %305 = vmatpush1.msra.mxu0 0.0
          %306 = vmatprep.subr.mxu0 0.0
          %307 = vmatpush1.msra.mxu0 0.0
          %308 = vmatprep.subr.mxu0 0.0
          %309 = vmatpush1.msra.mxu0 0.0
          %310 = vmatprep.subr.mxu0 0.0
          %311 = vmatpush1.msra.mxu0 0.0
          %312 = vmatprep.subr.mxu0 0.0
          %313 = vmatpush1.msra.mxu0 0.0
          %314 = vmatprep.subr.mxu0 0.0
          %315 = vmatpush1.msra.mxu0 0.0
          %316 = vmatprep.subr.mxu0 0.0
          %317 = vmatpush1.msra.mxu0 0.0
          %318 = vmatprep.subr.mxu0 0.0
          %319 = vmatpush1.msra.mxu0 0.0
          %320 = vmatprep.subr.mxu0 0.0
          %321 = vmatpush1.msra.mxu0 0.0
          %322 = vmatprep.subr.mxu0 0.0
          %323 = vmatpush1.msra.mxu0 0.0
          %324 = vmatprep.subr.mxu0 0.0
          %325 = vmatpush1.msra.mxu0 0.0
          %326 = vmatprep.subr.mxu0 0.0
          %327 = vmatpush1.msra.mxu0 0.0
          %328 = vmatprep.subr.mxu0 0.0
          %329 = vmatpush1.msra.mxu0 0.0
          %330 = vmatprep.subr.mxu0 0.0
          %331 = vmatpush1.msra.mxu0 0.0
          %332 = vmatprep.subr.mxu0 0.0
          %333 = vmatpush1.msra.mxu0 0.0
          %334 = vmatprep.mubr.f32.mxu0 0.0
          %335 = vmatmul.mubr.f32.gmra.mrb[0].mxu0 %v268
          %v336 = vpop.f32.mrb[0].mxu0
          %v337 = vadd.f32 0.0, %v336
          %v338 = vpop.f32.mrb[0].mxu0
          %339 = vdwg.mxu0
          %v340 = vmax.f32 %v337, 0.0
          %v341 = vld [vmem:[%s2] sm:$0xff]
          %v342 = vld [vmem:[%s2 + $0x8] sm:$0xff]
          %vm343 = vcmask 15360
          %v345 = vsel %vm343, %v341, 0
          %v348 = vsel %vm343, %v342, 0
          %vm350 = vcmask 1041408
          %v352 = vsel %vm350, %v340, 0
          %354 = vmatprep.subr.mxu0 0.0
          %355 = vmatpush1.msra.mxu0 %v352
          %356 = vmatprep.subr.mxu0 0.0
          %357 = vmatpush1.msra.mxu0 0.0
          %358 = vmatprep.subr.mxu0 0.0
          %359 = vmatpush1.msra.mxu0 0.0
          %360 = vmatprep.subr.mxu0 0.0
          %361 = vmatpush1.msra.mxu0 0.0
          %362 = vmatprep.subr.mxu0 0.0
          %363 = vmatpush1.msra.mxu0 0.0
          %364 = vmatprep.subr.mxu0 0.0
          %365 = vmatpush1.msra.mxu0 0.0
          %366 = vmatprep.subr.mxu0 0.0
          %367 = vmatpush1.msra.mxu0 0.0
          %368 = vmatprep.subr.mxu0 0.0
          %369 = vmatpush1.msra.mxu0 0.0
          %370 = vmatprep.subr.mxu0 0.0
          %371 = vmatpush1.msra.mxu0 0.0
          %372 = vmatprep.subr.mxu0 0.0
          %373 = vmatpush1.msra.mxu0 0.0
          %374 = vmatprep.subr.mxu0 0.0
          %375 = vmatpush1.msra.mxu0 0.0
          %376 = vmatprep.subr.mxu0 0.0
          %377 = vmatpush1.msra.mxu0 0.0
          %378 = vmatprep.subr.mxu0 0.0
          %379 = vmatpush1.msra.mxu0 0.0
          %380 = vmatprep.subr.mxu0 0.0
          %381 = vmatpush1.msra.mxu0 0.0
          %382 = vmatprep.subr.mxu0 0.0
          %383 = vmatpush1.msra.mxu0 0.0
          %384 = vmatprep.subr.mxu0 0.0
          %385 = vmatpush1.msra.mxu0 0.0
          %386 = vmatprep.subr.mxu0 0.0
          %387 = vmatpush1.msra.mxu0 0.0
          %388 = vmatprep.subr.mxu0 0.0
          %389 = vmatpush1.msra.mxu0 0.0
          %390 = vmatprep.subr.mxu0 0.0
          %391 = vmatpush1.msra.mxu0 0.0
          %392 = vmatprep.subr.mxu0 0.0
          %393 = vmatpush1.msra.mxu0 0.0
          %394 = vmatprep.subr.mxu0 0.0
          %395 = vmatpush1.msra.mxu0 0.0
          %396 = vmatprep.subr.mxu0 0.0
          %397 = vmatpush1.msra.mxu0 0.0
          %398 = vmatprep.subr.mxu0 0.0
          %399 = vmatpush1.msra.mxu0 0.0
          %400 = vmatprep.subr.mxu0 0.0
          %401 = vmatpush1.msra.mxu0 0.0
          %402 = vmatprep.subr.mxu0 0.0
          %403 = vmatpush1.msra.mxu0 0.0
          %404 = vmatprep.subr.mxu0 0.0
          %405 = vmatpush1.msra.mxu0 0.0
          %406 = vmatprep.subr.mxu0 0.0
          %407 = vmatpush1.msra.mxu0 0.0
          %408 = vmatprep.subr.mxu0 0.0
          %409 = vmatpush1.msra.mxu0 0.0
          %410 = vmatprep.subr.mxu0 0.0
          %411 = vmatpush1.msra.mxu0 0.0
          %412 = vmatprep.subr.mxu0 0.0
          %413 = vmatpush1.msra.mxu0 0.0
          %414 = vmatprep.subr.mxu0 0.0
          %415 = vmatpush1.msra.mxu0 0.0
          %416 = vmatprep.subr.mxu0 0.0
          %417 = vmatpush1.msra.mxu0 0.0
          %418 = vmatprep.mubr.f32.mxu0 0.0
          %419 = vmatmul.mubr.f32.gmra.mrb[0].mxu0 %v345
          %v420 = vpop.f32.mrb[0].mxu0
          %v421 = vadd.f32 0.0, %v420
          %v422 = vpop.f32.mrb[0].mxu0
          %423 = vmatprep.mubr.f32.mxu0 0.0
          %424 = vmatmul.mubr.f32.gmra.mrb[0].mxu0 %v348
          %v425 = vpop.f32.mrb[0].mxu0
          %v426 = vadd.f32 0.0, %v425
          %v427 = vpop.f32.mrb[0].mxu0
          %428 = vdwg.mxu0
          %431 = vrot.lane.b32.xlu0 %v421, 127
          %v432 = vpop.permute.xlu0 %431
          %433 = vrot.lane.b32.xlu0 %v426, 127
          %v434 = vpop.permute.xlu0 %433
          %v437 = vadd.f32 %v421, %v432
          %v438 = vadd.f32 %v426, %v434
          %v439 = vxor.u32 %v437, 2147483648
          %v440 = vxor.u32 %v438, 2147483648
          %v441 = vmul.f32 %v439, 1.442695
          %v442 = vpow.pop %v441
          %v443 = vmul.f32 %v440, 1.442695
          %v444 = vpow.pop %v443
          %v445 = vadd.f32 %v442, 1.0
          %v446 = vadd.f32 %v444, 1.0
          %v447 = vrcp.pop %v445
          %v448 = vmul.f32 1.0, %v447
          %v449 = vrcp.pop %v446
          %v450 = vmul.f32 1.0, %v449
          %451 = vst.msk [vmem:[%s207] sm:$0xff] %vm233, %v448
          %452 = vst.msk [vmem:[%s207 + $0x8] sm:$0xff] %vm233, %v450
        $region44: #{tpu_custom_call.1} parent=31 // pred_fallthru
          _
        %p453 = scmp.lt.s32.totalorder %s21, 1
        %s454 = scalar_select %p453, %s21, 1
        %s455 = smul.addr %s454, 2
        %s456 = smul.addr %s455, 8
        %s457 = scalar_lea.vmem %s3, %s456
        // Predicated region
        $region45: #{tpu_custom_call.1} parent=31 // pred_check
          %p458 = pneg %p117
        $region46: #{tpu_custom_call.1} parent=31 // pred_check_branch
          %460 = sbr.rel (%p458) target = $region48
        $region47: #{tpu_custom_call.1} parent=31 // pred_region
          _
        $region48: #{tpu_custom_call.1} parent=31 // pred_fallthru
          _
      $region32: #{tpu_custom_call.1} parent=5 // pred_fallthru
        _
      %p461 = scmp.le.s32.totalorder 2, %s12
      // Predicated region
      $region49: #{tpu_custom_call.1} parent=5 // pred_check
        %p462 = pneg %p461
      $region50: #{tpu_custom_call.1} parent=5 // pred_check_branch
        %464 = sbr.rel (%p462) target = $region52
      $region51: #{tpu_custom_call.1} parent=5 // pred_region
        %s465 = ssub.s32 %s12, 2
        // Predicated region
        $region53: #{tpu_custom_call.1} parent=51 // pred_check
          %p466 = pneg %p123
        $region54: #{tpu_custom_call.1} parent=51 // pred_check_branch
          %468 = sbr.rel (%p466) target = $region56
        $region55: #{tpu_custom_call.1} parent=51 // pred_region
          %p469 = scmp.lt.s32.totalorder %s23, 1
          %s470 = scalar_select %p469, %s23, 1
          %s471 = smul.addr %s470, 2
          %s472 = smul.addr %s471, 8
          %s473 = scalar_lea.vmem %s3, %s472
        $region56: #{tpu_custom_call.1} parent=51 // pred_fallthru
          _
      $region52: #{tpu_custom_call.1} parent=5 // pred_fallthru
        _
    $region6: #{tpu_custom_call.1} parent=1 // loop_footer
      %s16 = sadd.s32 1, %s12
    $region7: #{tpu_custom_call.1} parent=1 // loop_footer_branch
      %11 = sbr.rel target = $region3
    $region8: #{tpu_custom_call.1} parent=1 // loop_exit
      _
    %474 = vsyncpa [#allocation5], 1
    %s475 = scalar_lea.sflag [#allocation5], 1
    %476 = vsyncpa %s475, 1

</llo_original>
